<compile_context>
chip_gen: v6e
topology: v6e:2x2x1
jax: 0.10.0
libtpu: 0.0.40
codegen_flags: <defaults>
</compile_context>

<pallas_src>
import math

import jax
import jax.numpy as jnp
from jax.experimental import pallas as pl
from jax.experimental.pallas import tpu as pltpu


def _copy_kernel(x_ref, o_ref):
    # Pure materializing copy: lane-dense load + lane-dense store.
    o_ref[...] = x_ref[...]


def _flatten_shape(shape, start_dim, end_dim):
    nd = len(shape)
    end = end_dim if end_dim >= 0 else nd + end_dim
    start = start_dim if start_dim >= 0 else nd + start_dim
    middle = math.prod(shape[start:end + 1]) if end >= start else 1
    return tuple(shape[:start]) + (middle,) + tuple(shape[end + 1:])


def flatten(x, start_dim: int = 1, end_dim: int = -1):
    """Pallas-backed equivalent of torch.flatten(x, start_dim, end_dim)."""
    out_shape = _flatten_shape(x.shape, start_dim, end_dim)

    total = math.prod(x.shape) if x.ndim > 0 else 1

    # Lane-dense 2D view of the (contiguous, row-major) buffer: pick a last dim that is
    # a multiple of 128 whenever the element count allows, so loads/stores are unmasked.
    L = None
    for cand in (1024, 512, 256, 128):
        if total % cand == 0:
            L = cand
            break
    if L is None:
        # TODO(synk): odd-sized tensors fall back to a single (1, total) block; fine for
        # small inputs, would need padding/masking for large non-multiple-of-128 sizes.
        L = total
    R = total // L

    # Block sizing: target a few MiB per grid step (>= the ~512 KB/step needed to
    # amortize the ~0.35us fixed per-step overhead) while staying well inside v7x's
    # 32 MiB scoped VMEM even with double-buffered input + output blocks.
    itemsize = jnp.dtype(x.dtype).itemsize
    row_bytes = max(1, L * itemsize)
    max_block_bytes = 4 << 20
    R_blk = min(R, max(1, max_block_bytes // row_bytes))
    if R_blk < R:
        # keep the sublane (second-minor) block dim a multiple of 8
        R_blk = min(R, max(8, (R_blk // 8) * 8))

    grid = (pl.cdiv(R, R_blk),)

    # Contiguous reshape to the 2D copy view: metadata-only (bitcast), no HBM traffic.
    x2 = x.reshape(R, L)

    out2 = pl.pallas_call(
        _copy_kernel,
        out_shape=jax.ShapeDtypeStruct((R, L), x.dtype),
        grid=grid,
        in_specs=[pl.BlockSpec((R_blk, L), lambda i: (i, 0))],
        out_specs=pl.BlockSpec((R_blk, L), lambda i: (i, 0)),
        compiler_params=pltpu.CompilerParams(
            # Row tiles are fully independent -> shard across both TCs on v7x;
            # free/no-op on v5e/v6e.
            dimension_semantics=("parallel",),
        ),
    )(x2)

    # Final reshape to the flatten target shape: metadata-only.
    return out2.reshape(out_shape)


class Flatten:
    """Mirror of the PyTorch module's forward (no learnable parameters)."""

    def __init__(self, start_dim: int = 1, end_dim: int = -1):
        self.start_dim = start_dim
        self.end_dim = end_dim

    def __call__(self, x):
        return flatten(x, self.start_dim, self.end_dim)


if __name__ == "__main__":
    key = jax.random.PRNGKey(0)
    x = jax.random.normal(key, (2, 4, 16, 16), dtype=jnp.float32)

    configs = [
        dict(start_dim=1, end_dim=-1),  # module defaults: (2, 4, 16, 16) -> (2, 1024)
        dict(start_dim=0, end_dim=1),   # (2, 4, 16, 16) -> (8, 16, 16)
        dict(start_dim=2, end_dim=3),   # (2, 4, 16, 16) -> (2, 4, 256)
    ]
    for cfg in configs:
        mod = Flatten(**cfg)
        out = jax.block_until_ready(mod(x))
        ref = jnp.reshape(x, _flatten_shape(x.shape, cfg["start_dim"], cfg["end_dim"]))
        assert out.shape == ref.shape, (cfg, out.shape, ref.shape)
        assert out.dtype == x.dtype
        assert jnp.array_equal(out, ref), f"mismatch for config {cfg}"

    print("KERNEL_OK")
</pallas_src>

<mosaic_0001>
module attributes {stable_mosaic.version = 11 : i64} {
  func.func @_copy_kernel(%arg0: i32, %arg1: memref<2x1024xf32, #tpu.memory_space<vmem>>, %arg2: memref<2x1024xf32, #tpu.memory_space<vmem>>) attributes {dimension_semantics = [#tpu.dimension_semantics<parallel>], iteration_bounds = array<i64: 1>, scalar_prefetch = 0 : i64, scratch_operands = 0 : i64, tpu.core_type = #tpu.core_type<tc>, window_params = [{transform_indices = @transform_0, window_bounds = array<i64: 2, 1024>}, {transform_indices = @transform_1, window_bounds = array<i64: 2, 1024>}]} {
    %c0 = arith.constant 0 : index
    %c0_0 = arith.constant 0 : index
    %0 = vector.load %arg1[%c0, %c0_0] : memref<2x1024xf32, #tpu.memory_space<vmem>>, vector<2x1024xf32>
    %c0_1 = arith.constant 0 : index
    %c0_2 = arith.constant 0 : index
    %1 = vector.load %arg2[%c0_1, %c0_2] : memref<2x1024xf32, #tpu.memory_space<vmem>>, vector<2x1024xf32>
    tpu.vector_store %arg2[%c0_1, %c0_2], %0 {strides = array<i32>} : memref<2x1024xf32, #tpu.memory_space<vmem>>, vector<2x1024xf32>,
    return
  }
  func.func @transform_0(%arg0: i32) -> (i32, i32) {
    %c0_i32 = arith.constant 0 : i32
    %c0_i32_0 = arith.constant 0 : i32
    return %arg0, %c0_i32 : i32, i32
  }
  func.func @transform_1(%arg0: i32) -> (i32, i32) {
    %c0_i32 = arith.constant 0 : i32
    %c0_i32_0 = arith.constant 0 : i32
    return %arg0, %c0_i32 : i32, i32
  }
}

</mosaic_0001>

<llo_original>
// kernel: tpu_custom_call.1
$region0: #{tpu_custom_call.1}
  #allocation0 [shape = 'u32[]', space=smem, size = 0x4, offset = 0x4, fixed_abs, tag = 'smem constant byte address 0x4 - core index']
  #allocation1 [shape = 'u32[144,128]{1,0:T(1,128)}', space=vmem, size = 0x12000, scoped, tag = 'internal scratch']
  %s0 = inlined_call_operand.hbm [shape: f32[2,1024], index: 0, kind: input, shape index: {}]
  %s1 = inlined_call_operand.hbm [shape: f32[2,1024], index: 1, kind: output, shape index: {}]
  %s2 = sld [smem:[#allocation0]]
  $region18: #{tpu_custom_call.1} parent=0
    _
  %s4 = ssub.s32 1, %s2
  %s5 = scalar_select 0, %s4, %s2
  $region1: #{tpu_custom_call.1} parent=0
    #allocation2 [shape = 'u8[8192]{0}', space=vmem, size = 0x2000, scoped, tag = 'input window, operand 0, single buffered']
    #allocation3 [shape = 's32[1]{0}', space=sflag, size = 0x4, scoped, tag = 'scoped memory for tpu_custom_call.1']
    #allocation4 [shape = 's32[1]{0}', space=sflag, size = 0x4, scoped, tag = 'scoped memory for tpu_custom_call.1']
    #allocation5 [shape = 'u8[8192]{0}', space=vmem, size = 0x2000, scoped, tag = 'output window, operand 0, single buffered']
    %6 = vsyncpa [#allocation3], 0
    %7 = vsyncpa [#allocation4], 0
    // Predicated region
    $region2: #{tpu_custom_call.1} parent=1 // pred_check
      _
    $region3: #{tpu_custom_call.1} parent=1 // pred_check_branch
      %9 = sbr.rel (0) target = $region5
    $region4: #{tpu_custom_call.1} parent=1 // pred_region
      %s11 = ssub.s32 256, 256
      %12 = vsyncadd [#allocation3], %s11
      %s14 = sshll.u32 [#allocation2], 4
      %s15 = int_to_ptr.vmem [resolvable:$true] %s14
      %17 = dma.hbm_to_vmem [thread:$0]  %s0, 256, %s15, [#allocation3]
    $region5: #{tpu_custom_call.1} parent=1 // pred_fallthru
      _
    // Predicated region
    $region6: #{tpu_custom_call.1} parent=1 // pred_check
      _
    $region7: #{tpu_custom_call.1} parent=1 // pred_check_branch
      %19 = sbr.rel (0) target = $region9
    $region8: #{tpu_custom_call.1} parent=1 // pred_region
      %20 = dma.done [#allocation3], 256
    $region9: #{tpu_custom_call.1} parent=1 // pred_fallthru
      _
    %v21 = vld [vmem:[#allocation2] sm:$0xff]
    %v22 = vld [vmem:[#allocation2 + $0x8] sm:$0xff]
    %23 = vst [vmem:[#allocation5] sm:$0xff] %v21
    %24 = vst [vmem:[#allocation5 + $0x8] sm:$0xff] %v22
    // Predicated region
    $region10: #{tpu_custom_call.1} parent=1 // pred_check
      _
    $region11: #{tpu_custom_call.1} parent=1 // pred_check_branch
      %26 = sbr.rel (0) target = $region13
    $region12: #{tpu_custom_call.1} parent=1 // pred_region
      %s28 = ssub.s32 256, 256
      %29 = vsyncadd [#allocation4], %s28
      %s31 = sshll.u32 [#allocation5], 4
      %s32 = int_to_ptr.vmem [resolvable:$true] %s31
      %34 = dma.vmem_to_hbm [thread:$0]  %s32, 256, %s1, [#allocation4]
    $region13: #{tpu_custom_call.1} parent=1 // pred_fallthru
      _
    // Predicated region
    $region14: #{tpu_custom_call.1} parent=1 // pred_check
      _
    $region15: #{tpu_custom_call.1} parent=1 // pred_check_branch
      %36 = sbr.rel (0) target = $region17
    $region16: #{tpu_custom_call.1} parent=1 // pred_region
      %37 = dma.done [#allocation4], 256
    $region17: #{tpu_custom_call.1} parent=1 // pred_fallthru
      _
    %38 = vsyncpa [#allocation3], 1
    %39 = vsyncpa [#allocation4], 1

</llo_original>
